<compile_context>
chip_gen: v5e
topology: v5e:2x2
jax: 0.10.0
libtpu: 0.0.40
codegen_flags: <defaults>
</compile_context>

<pallas_src>
import jax
import jax.numpy as jnp
from jax.experimental import pallas as pl
from jax.experimental.pallas import tpu as pltpu


def _round_up(x: int, m: int) -> int:
    return (x + m - 1) // m * m


def _make_ctrnn_kernel(alpha: float, block_t: int):
    alpha = float(alpha)
    one_minus_alpha = 1.0 - alpha

    def kernel(xw_ref, w_h_ref, hid_ref, h_scratch):
        # Start of a batch tile's sequence: reset the carried hidden state
        # (matches init_hidden -> zeros).
        @pl.when(pl.program_id(1) == 0)
        def _():
            h_scratch[...] = jnp.zeros_like(h_scratch)

        w_h = w_h_ref[...]  # (hidden_p, hidden_p), constant across the grid

        def step(t, h):
            pre = xw_ref[t] + jnp.dot(h, w_h,
                                      preferred_element_type=jnp.float32)
            h_new = jnp.maximum(pre, 0.0)                # relu
            h = h * one_minus_alpha + h_new * alpha      # CTRNN blend
            hid_ref[t] = h.astype(hid_ref.dtype)
            return h

        h = jax.lax.fori_loop(0, block_t, step, h_scratch[...], unroll=True)
        h_scratch[...] = h

    return kernel


def ctrnn_forward(x, params, alpha=1.0, *, block_t=4, batch_tile=8):
    """x: (seq, batch, input) -> (output (seq,batch,out), hidden_all (seq,batch,hidden))."""
    seq, batch, _ = x.shape
    hidden = params["w_h"].shape[0]

    w_in_t = params["w_in"].T                 # (input, hidden)
    w_h_t = params["w_h"].T                   # (hidden, hidden)
    w_out_t = params["w_out"].T               # (hidden, out)
    bias = params["b_in"] + params["b_h"]     # folded recurrence bias

    # ---- hoisted input projection: one big matmul over all timesteps -------
    xw = jnp.einsum("sbi,ih->sbh", x, w_in_t) + bias      # (seq, batch, hidden)

    # ---- pad to TPU-friendly shapes -----------------------------------------
    hidden_p = _round_up(hidden, 128)          # lane-dense last dim
    batch_p = _round_up(batch, batch_tile)     # sublane-dense rows (>=8 for f32)
    seq_p = _round_up(seq, block_t)            # whole number of time blocks

    xw_p = jnp.pad(xw, ((0, seq_p - seq), (0, batch_p - batch),
                        (0, hidden_p - hidden)))
    w_h_p = jnp.pad(w_h_t, ((0, hidden_p - hidden), (0, hidden_p - hidden)))

    nb = batch_p // batch_tile
    ns = seq_p // block_t

    kernel = _make_ctrnn_kernel(alpha, block_t)

    grid_spec = pltpu.PrefetchScalarGridSpec(
        num_scalar_prefetch=0,
        grid=(nb, ns),
        in_specs=[
            # BLOCK_T timesteps of one batch tile of the precomputed xw.
            pl.BlockSpec((block_t, batch_tile, hidden_p),
                         lambda b, s: (s, b, 0)),
            # Constant h2h weight (block index never changes).
            pl.BlockSpec((hidden_p, hidden_p), lambda b, s: (0, 0)),
        ],
        out_specs=pl.BlockSpec((block_t, batch_tile, hidden_p),
                               lambda b, s: (s, b, 0)),
        scratch_shapes=[pltpu.VMEM((batch_tile, hidden_p), jnp.float32)],
    )

    hid_p = pl.pallas_call(
        kernel,
        grid_spec=grid_spec,
        out_shape=jax.ShapeDtypeStruct((seq_p, batch_p, hidden_p), jnp.float32),
        compiler_params=pltpu.CompilerParams(
            # batch tiles independent (megacore-parallel on v7x);
            # seq axis carries the recurrence -> sequential.
            dimension_semantics=("parallel", "arbitrary")),
    )(xw_p, w_h_p)

    hidden_all = hid_p[:seq, :batch, :hidden]

    # ---- hoisted output projection: one big matmul over all timesteps ------
    output = jnp.einsum("sbh,ho->sbo", hidden_all, w_out_t) + params["b_out"]
    return output, hidden_all


def init_params(key, input_size, hidden_size, output_size):
    k1, k2, k3, k4, k5 = jax.random.split(key, 5)
    # input2h: nn.Linear-style uniform init
    bound_in = 1.0 / jnp.sqrt(input_size)
    w_in = jax.random.uniform(k1, (hidden_size, input_size), jnp.float32,
                              -bound_in, bound_in)
    b_in = jax.random.uniform(k2, (hidden_size,), jnp.float32,
                              -bound_in, bound_in)
    # h2h: orthogonal init via QR of a random gaussian
    g = jax.random.normal(k3, (hidden_size, hidden_size), jnp.float32)
    q, r = jnp.linalg.qr(g)
    w_h = q * jnp.sign(jnp.diag(r))[None, :]
    bound_h = 1.0 / jnp.sqrt(hidden_size)
    b_h = jax.random.uniform(k4, (hidden_size,), jnp.float32, -bound_h, bound_h)
    # h2out
    w_out = jax.random.uniform(k5, (output_size, hidden_size), jnp.float32,
                               -bound_h, bound_h)
    b_out = jnp.zeros((output_size,), jnp.float32)
    return {"w_in": w_in, "b_in": b_in, "w_h": w_h, "b_h": b_h,
            "w_out": w_out, "b_out": b_out}


def ctrnn_reference(x, params, alpha=1.0):
    """Pure-JAX reference matching the PyTorch forward."""
    seq, batch, _ = x.shape
    h = jnp.zeros((batch, params["w_h"].shape[0]), jnp.float32)
    hs = []
    for s in range(seq):
        pre = (x[s] @ params["w_in"].T + params["b_in"]
               + h @ params["w_h"].T + params["b_h"])
        h_new = jnp.maximum(pre, 0.0)
        h = h * (1.0 - alpha) + h_new * alpha
        hs.append(h)
    hidden_all = jnp.stack(hs, axis=0)
    output = hidden_all @ params["w_out"].T + params["b_out"]
    return output, hidden_all


if __name__ == "__main__":
    seq, batch = 10, 4                      # exercises seq + batch padding
    input_size, hidden_size, output_size = 16, 32, 8

    key = jax.random.PRNGKey(0)
    kx, kp = jax.random.split(key)
    x = jax.random.normal(kx, (seq, batch, input_size), jnp.float32)
    params = init_params(kp, input_size, hidden_size, output_size)

    # dt=None -> alpha=1 (module default), dt=20 -> alpha=0.2 (full blend path)
    for dt in (None, 20.0):
        alpha = 1.0 if dt is None else dt / 100.0
        out, hid = ctrnn_forward(x, params, alpha=alpha, block_t=4)
        out = jax.block_until_ready(out)
        hid = jax.block_until_ready(hid)

        out_ref, hid_ref = ctrnn_reference(x, params, alpha=alpha)
        assert jnp.allclose(hid, hid_ref, atol=1e-4, rtol=1e-4), f"hidden mismatch (dt={dt})"
        assert jnp.allclose(out, out_ref, atol=1e-4, rtol=1e-4), f"output mismatch (dt={dt})"

    print("KERNEL_OK")
</pallas_src>

<mosaic_0001>
module attributes {stable_mosaic.version = 11 : i64} {
  func.func @kernel(%arg0: i32, %arg1: i32, %arg2: memref<4x8x128xf32, #tpu.memory_space<vmem>>, %arg3: memref<128x128xf32, #tpu.memory_space<vmem>>, %arg4: memref<4x8x128xf32, #tpu.memory_space<vmem>>, %arg5: memref<8x128xf32, #tpu.memory_space<vmem>>) attributes {dimension_semantics = [#tpu.dimension_semantics<parallel>, #tpu.dimension_semantics<arbitrary>], iteration_bounds = array<i64: 1, 3>, scalar_prefetch = 0 : i64, scratch_operands = 1 : i64, tpu.core_type = #tpu.core_type<tc>, window_params = [{transform_indices = @transform_0, window_bounds = array<i64: 4, 8, 128>}, {pipeline_mode = #tpu.pipeline_mode<synchronous>, transform_indices = @transform_1, window_bounds = array<i64: 128, 128>}, {transform_indices = @transform_2, window_bounds = array<i64: 4, 8, 128>}]} {
    %c0_i32 = arith.constant 0 : i32
    %0 = arith.cmpi eq, %arg1, %c0_i32 : i32
    %1 = arith.extui %0 : i1 to i32
    %c0_i32_0 = arith.constant 0 : i32
    %2 = arith.cmpi ne, %1, %c0_i32_0 : i32
    scf.if %2 {
      %cst_38 = arith.constant 0.000000e+00 : f32
      %70 = vector.broadcast %cst_38 : f32 to vector<8x128xf32>
      %c0_39 = arith.constant 0 : index
      %c0_40 = arith.constant 0 : index
      %71 = vector.load %arg5[%c0_39, %c0_40] : memref<8x128xf32, #tpu.memory_space<vmem>>, vector<8x128xf32>
      tpu.vector_store %arg5[%c0_39, %c0_40], %70 {strides = array<i32>} : memref<8x128xf32, #tpu.memory_space<vmem>>, vector<8x128xf32>,
    } else {
    }
    %c0 = arith.constant 0 : index
    %c0_1 = arith.constant 0 : index
    %3 = vector.load %arg3[%c0, %c0_1] : memref<128x128xf32, #tpu.memory_space<vmem>>, vector<128x128xf32>
    %c0_2 = arith.constant 0 : index
    %c0_3 = arith.constant 0 : index
    %4 = vector.load %arg5[%c0_2, %c0_3] : memref<8x128xf32, #tpu.memory_space<vmem>>, vector<8x128xf32>
    %c0_i32_4 = arith.constant 0 : i32
    %5 = arith.index_cast %c0_i32_4 : i32 to index
    %c0_5 = arith.constant 0 : index
    %c0_6 = arith.constant 0 : index
    %6 = vector.load %arg2[%5, %c0_5, %c0_6] : memref<4x8x128xf32, #tpu.memory_space<vmem>>, vector<1x8x128xf32>
    %7 = vector.shape_cast %6 : vector<1x8x128xf32> to vector<8x128xf32>
    %cst = arith.constant dense<0.000000e+00> : vector<8x128xf32>
    %8 = tpu.matmul %4, %3, %cst {dimension_numbers = #tpu.dot_dimension_numbers<[1], [0], [0], [1], [0, 0, 1, 1], [], []>} : vector<8x128xf32>, vector<128x128xf32>, vector<8x128xf32> -> vector<8x128xf32>
    %9 = arith.addf %7, %8 : vector<8x128xf32>
    %cst_7 = arith.constant 0.000000e+00 : f32
    %10 = vector.broadcast %cst_7 : f32 to vector<8x128xf32>
    %11 = arith.maximumf %9, %10 : vector<8x128xf32>
    %cst_8 = arith.constant 0.000000e+00 : f32
    %12 = vector.broadcast %cst_8 : f32 to vector<8x128xf32>
    %13 = arith.mulf %4, %12 : vector<8x128xf32>
    %cst_9 = arith.constant 1.000000e+00 : f32
    %14 = vector.broadcast %cst_9 : f32 to vector<8x128xf32>
    %15 = arith.mulf %11, %14 : vector<8x128xf32>
    %16 = arith.addf %13, %15 : vector<8x128xf32>
    %17 = arith.index_cast %c0_i32_4 : i32 to index
    %c0_10 = arith.constant 0 : index
    %c0_11 = arith.constant 0 : index
    %18 = vector.load %arg4[%17, %c0_10, %c0_11] : memref<4x8x128xf32, #tpu.memory_space<vmem>>, vector<1x8x128xf32>
    %19 = vector.shape_cast %18 : vector<1x8x128xf32> to vector<8x128xf32>
    %20 = vector.shape_cast %16 : vector<8x128xf32> to vector<1x8x128xf32>
    tpu.vector_store %arg4[%17, %c0_10, %c0_11], %20 {strides = array<i32>} : memref<4x8x128xf32, #tpu.memory_space<vmem>>, vector<1x8x128xf32>,
    %c1_i32 = arith.constant 1 : i32
    %21 = arith.index_cast %c1_i32 : i32 to index
    %c0_12 = arith.constant 0 : index
    %c0_13 = arith.constant 0 : index
    %22 = vector.load %arg2[%21, %c0_12, %c0_13] : memref<4x8x128xf32, #tpu.memory_space<vmem>>, vector<1x8x128xf32>
    %23 = vector.shape_cast %22 : vector<1x8x128xf32> to vector<8x128xf32>
    %cst_14 = arith.constant dense<0.000000e+00> : vector<8x128xf32>
    %24 = tpu.matmul %16, %3, %cst_14 {dimension_numbers = #tpu.dot_dimension_numbers<[1], [0], [0], [1], [0, 0, 1, 1], [], []>} : vector<8x128xf32>, vector<128x128xf32>, vector<8x128xf32> -> vector<8x128xf32>
    %25 = arith.addf %23, %24 : vector<8x128xf32>
    %cst_15 = arith.constant 0.000000e+00 : f32
    %26 = vector.broadcast %cst_15 : f32 to vector<8x128xf32>
    %27 = arith.maximumf %25, %26 : vector<8x128xf32>
    %cst_16 = arith.constant 0.000000e+00 : f32
    %28 = vector.broadcast %cst_16 : f32 to vector<8x128xf32>
    %29 = arith.mulf %16, %28 : vector<8x128xf32>
    %cst_17 = arith.constant 1.000000e+00 : f32
    %30 = vector.broadcast %cst_17 : f32 to vector<8x128xf32>
    %31 = arith.mulf %27, %30 : vector<8x128xf32>
    %32 = arith.addf %29, %31 : vector<8x128xf32>
    %33 = arith.index_cast %c1_i32 : i32 to index
    %c0_18 = arith.constant 0 : index
    %c0_19 = arith.constant 0 : index
    %34 = vector.load %arg4[%33, %c0_18, %c0_19] : memref<4x8x128xf32, #tpu.memory_space<vmem>>, vector<1x8x128xf32>
    %35 = vector.shape_cast %34 : vector<1x8x128xf32> to vector<8x128xf32>
    %36 = vector.shape_cast %32 : vector<8x128xf32> to vector<1x8x128xf32>
    tpu.vector_store %arg4[%33, %c0_18, %c0_19], %36 {strides = array<i32>} : memref<4x8x128xf32, #tpu.memory_space<vmem>>, vector<1x8x128xf32>,
    %c2_i32 = arith.constant 2 : i32
    %37 = arith.index_cast %c2_i32 : i32 to index
    %c0_20 = arith.constant 0 : index
    %c0_21 = arith.constant 0 : index
    %38 = vector.load %arg2[%37, %c0_20, %c0_21] : memref<4x8x128xf32, #tpu.memory_space<vmem>>, vector<1x8x128xf32>
    %39 = vector.shape_cast %38 : vector<1x8x128xf32> to vector<8x128xf32>
    %cst_22 = arith.constant dense<0.000000e+00> : vector<8x128xf32>
    %40 = tpu.matmul %32, %3, %cst_22 {dimension_numbers = #tpu.dot_dimension_numbers<[1], [0], [0], [1], [0, 0, 1, 1], [], []>} : vector<8x128xf32>, vector<128x128xf32>, vector<8x128xf32> -> vector<8x128xf32>
    %41 = arith.addf %39, %40 : vector<8x128xf32>
    %cst_23 = arith.constant 0.000000e+00 : f32
    %42 = vector.broadcast %cst_23 : f32 to vector<8x128xf32>
    %43 = arith.maximumf %41, %42 : vector<8x128xf32>
    %cst_24 = arith.constant 0.000000e+00 : f32
    %44 = vector.broadcast %cst_24 : f32 to vector<8x128xf32>
    %45 = arith.mulf %32, %44 : vector<8x128xf32>
    %cst_25 = arith.constant 1.000000e+00 : f32
    %46 = vector.broadcast %cst_25 : f32 to vector<8x128xf32>
    %47 = arith.mulf %43, %46 : vector<8x128xf32>
    %48 = arith.addf %45, %47 : vector<8x128xf32>
    %49 = arith.index_cast %c2_i32 : i32 to index
    %c0_26 = arith.constant 0 : index
    %c0_27 = arith.constant 0 : index
    %50 = vector.load %arg4[%49, %c0_26, %c0_27] : memref<4x8x128xf32, #tpu.memory_space<vmem>>, vector<1x8x128xf32>
    %51 = vector.shape_cast %50 : vector<1x8x128xf32> to vector<8x128xf32>
    %52 = vector.shape_cast %48 : vector<8x128xf32> to vector<1x8x128xf32>
    tpu.vector_store %arg4[%49, %c0_26, %c0_27], %52 {strides = array<i32>} : memref<4x8x128xf32, #tpu.memory_space<vmem>>, vector<1x8x128xf32>,
    %c3_i32 = arith.constant 3 : i32
    %53 = arith.index_cast %c3_i32 : i32 to index
    %c0_28 = arith.constant 0 : index
    %c0_29 = arith.constant 0 : index
    %54 = vector.load %arg2[%53, %c0_28, %c0_29] : memref<4x8x128xf32, #tpu.memory_space<vmem>>, vector<1x8x128xf32>
    %55 = vector.shape_cast %54 : vector<1x8x128xf32> to vector<8x128xf32>
    %cst_30 = arith.constant dense<0.000000e+00> : vector<8x128xf32>
    %56 = tpu.matmul %48, %3, %cst_30 {dimension_numbers = #tpu.dot_dimension_numbers<[1], [0], [0], [1], [0, 0, 1, 1], [], []>} : vector<8x128xf32>, vector<128x128xf32>, vector<8x128xf32> -> vector<8x128xf32>
    %57 = arith.addf %55, %56 : vector<8x128xf32>
    %cst_31 = arith.constant 0.000000e+00 : f32
    %58 = vector.broadcast %cst_31 : f32 to vector<8x128xf32>
    %59 = arith.maximumf %57, %58 : vector<8x128xf32>
    %cst_32 = arith.constant 0.000000e+00 : f32
    %60 = vector.broadcast %cst_32 : f32 to vector<8x128xf32>
    %61 = arith.mulf %48, %60 : vector<8x128xf32>
    %cst_33 = arith.constant 1.000000e+00 : f32
    %62 = vector.broadcast %cst_33 : f32 to vector<8x128xf32>
    %63 = arith.mulf %59, %62 : vector<8x128xf32>
    %64 = arith.addf %61, %63 : vector<8x128xf32>
    %65 = arith.index_cast %c3_i32 : i32 to index
    %c0_34 = arith.constant 0 : index
    %c0_35 = arith.constant 0 : index
    %66 = vector.load %arg4[%65, %c0_34, %c0_35] : memref<4x8x128xf32, #tpu.memory_space<vmem>>, vector<1x8x128xf32>
    %67 = vector.shape_cast %66 : vector<1x8x128xf32> to vector<8x128xf32>
    %68 = vector.shape_cast %64 : vector<8x128xf32> to vector<1x8x128xf32>
    tpu.vector_store %arg4[%65, %c0_34, %c0_35], %68 {strides = array<i32>} : memref<4x8x128xf32, #tpu.memory_space<vmem>>, vector<1x8x128xf32>,
    %c4_i32 = arith.constant 4 : i32
    %c0_36 = arith.constant 0 : index
    %c0_37 = arith.constant 0 : index
    %69 = vector.load %arg5[%c0_36, %c0_37] : memref<8x128xf32, #tpu.memory_space<vmem>>, vector<8x128xf32>
    tpu.vector_store %arg5[%c0_36, %c0_37], %64 {strides = array<i32>} : memref<8x128xf32, #tpu.memory_space<vmem>>, vector<8x128xf32>,
    return
  }
  func.func @transform_0(%arg0: i32, %arg1: i32) -> (i32, i32, i32) {
    %c0_i32 = arith.constant 0 : i32
    %c0_i32_0 = arith.constant 0 : i32
    return %arg1, %arg0, %c0_i32 : i32, i32, i32
  }
  func.func @transform_1(%arg0: i32, %arg1: i32) -> (i32, i32) {
    %c0_i32 = arith.constant 0 : i32
    %c0_i32_0 = arith.constant 0 : i32
    %c0_i32_1 = arith.constant 0 : i32
    return %c0_i32, %c0_i32_0 : i32, i32
  }
  func.func @transform_2(%arg0: i32, %arg1: i32) -> (i32, i32, i32) {
    %c0_i32 = arith.constant 0 : i32
    %c0_i32_0 = arith.constant 0 : i32
    return %arg1, %arg0, %c0_i32 : i32, i32, i32
  }
}

</mosaic_0001>

<llo_original>
// kernel: tpu_custom_call.1
$region0: #{tpu_custom_call.1}
  #allocation0 [shape = 'u32[]', space=smem, size = 0x4, offset = 0x4, fixed_abs, tag = 'smem constant byte address 0x4 - core index']
  #allocation1 [shape = 'u32[72,128]{1,0:T(1,128)}', space=vmem, size = 0x9000, scoped, tag = 'internal scratch']
  #allocation2 [shape = 'f32[8,128]{1,0:T(8,128)}', space=vmem, size = 0x1000, scoped, tag = 'scratch operand']
  %s0 = inlined_call_operand.hbm [shape: f32[12,8,128], index: 0, kind: input, shape index: {}]
  %s1 = inlined_call_operand.hbm [shape: f32[128,128], index: 1, kind: input, shape index: {}]
  %s2 = inlined_call_operand.hbm [shape: f32[12,8,128], index: 2, kind: output, shape index: {}]
  %s3 = sld [smem:[#allocation0]]
  $region53: #{tpu_custom_call.1} parent=0
    _
  %s5 = ssub.s32 1, %s3
  %s6 = scalar_select 0, %s5, %s3
  $region1: #{tpu_custom_call.1} parent=0
    #allocation3 [shape = 'u8[32768]{0}', space=vmem, size = 0x8000, scoped, tag = 'input window, operand 0']
    #allocation4 [shape = 's32[2]{0}', space=sflag, size = 0x8, scoped, tag = 'scoped memory for tpu_custom_call.1']
    #allocation5 [shape = 's32[2]{0}', space=sflag, size = 0x8, scoped, tag = 'scoped memory for tpu_custom_call.1']
    #allocation6 [shape = 'u8[65536]{0}', space=vmem, size = 0x10000, scoped, tag = 'input window, operand 1, single buffered']
    #allocation7 [shape = 's32[1]{0}', space=sflag, size = 0x4, scoped, tag = 'scoped memory for tpu_custom_call.1']
    #allocation8 [shape = 'u8[32768]{0}', space=vmem, size = 0x8000, scoped, tag = 'output window, operand 0']
    %7 = vsyncpa [#allocation4], 0
    %s8 = scalar_lea.sflag [#allocation4], 1
    %9 = vsyncpa %s8, 0
    %10 = vsyncpa [#allocation7], 0
    %11 = vsyncpa [#allocation5], 0
    %s12 = scalar_lea.sflag [#allocation5], 1
    %13 = vsyncpa %s12, 0
    loop: start=0, step=1, limit=5
    $region2: #{tpu_custom_call.1} parent=1 // loop_pre_header
      _
    $region3: #{tpu_custom_call.1} parent=1 // loop_header
      %s15 = sphi 0, %s19
      %p16 = scmp.ge.s32.totalorder %s15, 5
      %s22 = sphi 0, %s34
      %s23 = sphi 0, %s30
      %s24 = sphi 0, %s22
      %s25 = sphi 0, %s23
      %s26 = sphi 0, %s24
      %s27 = sphi 0, %s25
      %s39 = sphi 0, %s41
      %s42 = sphi 0, %s39
      %s43 = sphi 0, %s42
      %s59 = sphi 0, %s43
      %s63 = sphi 0, %s63
      %s65 = sphi 0, %s63
      %s66 = sphi 0, %s65
      %s80 = sphi 0, %s66
      %s88 = sphi 0, %s90
      %s91 = sphi 0, %s88
      %s92 = sphi 0, %s91
      %s108 = sphi 0, %s92
    $region4: #{tpu_custom_call.1} parent=1 // loop_header_branch
      %18 = sbr.rel (%p16) target = $region8
    $region5: #{tpu_custom_call.1} parent=1 // loop_body
      %s20 = ssub.s32 %s15, 1
      %s21 = ssub.s32 %s15, 2
      %s28 = sadd.s32 1, %s23
      %p29 = scmp.ge.s32.totalorder %s28, 3
      %s30 = scalar_select %p29, 0, %s28
      %s31 = sadd.s32 1, %s22
      %s32 = scalar_select %p29, %s31, %s22
      %p33 = scmp.ge.s32.totalorder %s32, 1
      %s34 = scalar_select %p33, 0, %s32
      %s35 = ssub.s32 %s23, %s30
      %s36 = ssub.s32 %s22, %s34
      %s37 = sor.u32 %s35, %s36
      %p38 = scmp.eq.s32.totalorder %s37, 0
      %s40 = sadd.s32 %s39, 1
      %s41 = scalar_select %p38, %s39, %s40
      %p44 = pneg %p38
      %p45 = scmp.eq.s32.totalorder %s15, 2
      %p46 = por %p44, %p45
      %p47 = scmp.ne.s32.totalorder %s39, %s42
      %p48 = scmp.eq.s32.totalorder %s15, 0
      %p49 = por %p47, %p48
      %p50 = scmp.ne.s32.totalorder %s39, %s42
      %p51 = scmp.eq.s32.totalorder %s20, 2
      %p52 = por %p50, %p51
      %p53 = scmp.ne.s32.totalorder %s42, %s43
      %p54 = scmp.eq.s32.totalorder %s20, 0
      %p55 = por %p53, %p54
      %p56 = scmp.ne.s32.totalorder %s42, %s43
      %p57 = scmp.eq.s32.totalorder %s21, 2
      %p58 = por %p56, %p57
      %p60 = scmp.ne.s32.totalorder %s43, %s59
      %p61 = scmp.eq.s32.totalorder %s21, 0
      %p62 = por %p60, %p61
      %s64 = sadd.s32 %s63, 1
      %p67 = scmp.eq.s32.totalorder %s15, 2
      %p68 = scmp.ne.s32.totalorder %s63, %s65
      %p69 = scmp.eq.s32.totalorder %s15, 0
      %p70 = por %p68, %p69
      %p71 = scmp.ne.s32.totalorder %s63, %s65
      %p72 = scmp.eq.s32.totalorder %s20, 2
      %p73 = por %p71, %p72
      %p74 = scmp.ne.s32.totalorder %s65, %s66
      %p75 = scmp.eq.s32.totalorder %s20, 0
      %p76 = por %p74, %p75
      %p77 = scmp.ne.s32.totalorder %s65, %s66
      %p78 = scmp.eq.s32.totalorder %s21, 2
      %p79 = por %p77, %p78
      %p81 = scmp.ne.s32.totalorder %s66, %s80
      %p82 = scmp.eq.s32.totalorder %s21, 0
      %p83 = por %p81, %p82
      %s84 = ssub.s32 %s23, %s30
      %s85 = ssub.s32 %s22, %s34
      %s86 = sor.u32 %s84, %s85
      %p87 = scmp.eq.s32.totalorder %s86, 0
      %s89 = sadd.s32 %s88, 1
      %s90 = scalar_select %p87, %s88, %s89
      %p93 = pneg %p87
      %p94 = scmp.eq.s32.totalorder %s15, 2
      %p95 = por %p93, %p94
      %p96 = scmp.ne.s32.totalorder %s88, %s91
      %p97 = scmp.eq.s32.totalorder %s15, 0
      %p98 = por %p96, %p97
      %p99 = scmp.ne.s32.totalorder %s88, %s91
      %p100 = scmp.eq.s32.totalorder %s20, 2
      %p101 = por %p99, %p100
      %p102 = scmp.ne.s32.totalorder %s91, %s92
      %p103 = scmp.eq.s32.totalorder %s20, 0
      %p104 = por %p102, %p103
      %p105 = scmp.ne.s32.totalorder %s91, %s92
      %p106 = scmp.eq.s32.totalorder %s21, 2
      %p107 = por %p105, %p106
      %p109 = scmp.ne.s32.totalorder %s92, %s108
      %p110 = scmp.eq.s32.totalorder %s21, 0
      %p111 = por %p109, %p110
      %p112 = scmp.le.s32.totalorder 1, %s15
      %p113 = scmp.lt.s32.totalorder %s15, 4
      %p114 = pnand %p112, %p113
      %p115 = pneg %p114
      // Predicated region
      $region9: #{tpu_custom_call.1} parent=5 // pred_check
        _
      $region10: #{tpu_custom_call.1} parent=5 // pred_check_branch
        %117 = sbr.rel (%p114) target = $region12
      $region11: #{tpu_custom_call.1} parent=5 // pred_region
        %s118 = ssub.s32 %s15, 1
        // Predicated region
        $region13: #{tpu_custom_call.1} parent=11 // pred_check
          %p119 = pneg %p76
        $region14: #{tpu_custom_call.1} parent=11 // pred_check_branch
          %121 = sbr.rel (%p119) target = $region16
        $region15: #{tpu_custom_call.1} parent=11 // pred_region
          %123 = vsyncadd [#allocation7], 0
          %s124 = sshll.u32 %s1, 4
          %s125 = int_to_ptr.hbm [resolvable:$true] %s124
          %s126 = sshll.u32 [#allocation6], 4
          %s127 = int_to_ptr.vmem [resolvable:$true] %s126
          %132 = dma.hbm_to_vmem [thread:$0]  %s125, 2048, %s127, [#allocation7], 128, 128, 8
        $region16: #{tpu_custom_call.1} parent=11 // pred_fallthru
          _
      $region12: #{tpu_custom_call.1} parent=5 // pred_fallthru
        _
      %p133 = scmp.lt.s32.totalorder %s15, 3
      // Predicated region
      $region17: #{tpu_custom_call.1} parent=5 // pred_check
        %p134 = pneg %p133
      $region18: #{tpu_custom_call.1} parent=5 // pred_check_branch
        %136 = sbr.rel (%p134) target = $region20
      $region19: #{tpu_custom_call.1} parent=5 // pred_region
        // Predicated region
        $region21: #{tpu_custom_call.1} parent=19 // pred_check
          %p137 = pneg %p49
        $region22: #{tpu_custom_call.1} parent=19 // pred_check_branch
          %139 = sbr.rel (%p137) target = $region24
        $region23: #{tpu_custom_call.1} parent=19 // pred_region
          %s140 = sand.u32 %s39, 1
          %s141 = scalar_lea.sflag [#allocation4], %s140
          %s142 = sand.u32 %s39, 1
          %s143 = smul.addr %s142, 32
          %s144 = scalar_lea.vmem [#allocation3], %s143
          %s145 = smul.u32 4, %s23
          %147 = vsyncadd %s141, 0
          %s148 = sadd.s32 %s22, %s145
          %s149 = smul.addr %s148, 8
          %s150 = scalar_lea.hbm %s0, %s149
          %s151 = sshll.u32 %s150, 4
          %s152 = int_to_ptr.hbm [resolvable:$true] %s151
          %s153 = sshll.u32 %s144, 4
          %s154 = int_to_ptr.vmem [resolvable:$true] %s153
          %159 = dma.hbm_to_vmem [thread:$0]  %s152, 512, %s154, %s141, 128, 128, 8
        $region24: #{tpu_custom_call.1} parent=19 // pred_fallthru
          _
      $region20: #{tpu_custom_call.1} parent=5 // pred_fallthru
        _
      %p160 = scmp.le.s32.totalorder 1, %s15
      %p161 = scmp.lt.s32.totalorder %s15, 4
      %p162 = pnand %p160, %p161
      %p163 = pneg %p162
      // Predicated region
      $region25: #{tpu_custom_call.1} parent=5 // pred_check
        _
      $region26: #{tpu_custom_call.1} parent=5 // pred_check_branch
        %165 = sbr.rel (%p162) target = $region28
      $region27: #{tpu_custom_call.1} parent=5 // pred_region
        %s166 = ssub.s32 %s15, 1
        %s167 = sand.u32 %s42, 1
        %s168 = scalar_lea.sflag [#allocation4], %s167
        %s169 = sand.u32 %s42, 1
        %s170 = smul.addr %s169, 32
        %s171 = scalar_lea.vmem [#allocation3], %s170
        // Predicated region
        $region29: #{tpu_custom_call.1} parent=27 // pred_check
          %p172 = pneg %p55
        $region30: #{tpu_custom_call.1} parent=27 // pred_check_branch
          %174 = sbr.rel (%p172) target = $region32
        $region31: #{tpu_custom_call.1} parent=27 // pred_region
          %176 = dma.done %s168, 512
        $region32: #{tpu_custom_call.1} parent=27 // pred_fallthru
          _
        // Predicated region
        $region33: #{tpu_custom_call.1} parent=27 // pred_check
          %p177 = pneg %p76
        $region34: #{tpu_custom_call.1} parent=27 // pred_check_branch
          %179 = sbr.rel (%p177) target = $region36
        $region35: #{tpu_custom_call.1} parent=27 // pred_region
          %181 = dma.done [#allocation7], 2048
        $region36: #{tpu_custom_call.1} parent=27 // pred_fallthru
          _
        %s182 = sand.u32 %s42, 1
        %s183 = scalar_lea.sflag [#allocation4], %s182
        %s184 = sand.u32 %s42, 1
        %s185 = smul.addr %s184, 32
        %s186 = scalar_lea.vmem [#allocation3], %s185
        %p187 = pneg %p55
        %p188 = pneg %p52
        %p189 = pneg %p76
        %p190 = pneg %p73
        %p191 = pneg %p104
        %p192 = pneg %p101
        %s193 = sand.u32 %s91, 1
        %s194 = scalar_lea.sflag [#allocation5], %s193
        %s195 = sand.u32 %s91, 1
        %s196 = smul.addr %s195, 32
        %s197 = scalar_lea.vmem [#allocation8], %s196
        %s198 = smul.u32 4, %s25
        %s199 = smul.u32 4, %s25
        %p200 = scmp.eq.s32.totalorder %s25, 0
        // Predicated region
        $region37: #{tpu_custom_call.1} parent=27 // pred_check
          %p201 = pneg %p200
        $region38: #{tpu_custom_call.1} parent=27 // pred_check_branch
          %203 = sbr.rel (%p201) target = $region40
        $region39: #{tpu_custom_call.1} parent=27 // pred_region
          %204 = vst [vmem:[#allocation2] sm:$0xff] 0.0
        $region40: #{tpu_custom_call.1} parent=27 // pred_fallthru
          _
        %v205 = vld [vmem:[#allocation6] sm:$0xff]
        %v206 = vld [vmem:[#allocation6 + $0x8] sm:$0xff]
        %v207 = vld [vmem:[#allocation6 + $0x10] sm:$0xff]
        %v208 = vld [vmem:[#allocation6 + $0x18] sm:$0xff]
        %v209 = vld [vmem:[#allocation6 + $0x20] sm:$0xff]
        %v210 = vld [vmem:[#allocation6 + $0x28] sm:$0xff]
        %v211 = vld [vmem:[#allocation6 + $0x30] sm:$0xff]
        %v212 = vld [vmem:[#allocation6 + $0x38] sm:$0xff]
        %v213 = vld [vmem:[#allocation6 + $0x40] sm:$0xff]
        %v214 = vld [vmem:[#allocation6 + $0x48] sm:$0xff]
        %v215 = vld [vmem:[#allocation6 + $0x50] sm:$0xff]
        %v216 = vld [vmem:[#allocation6 + $0x58] sm:$0xff]
        %v217 = vld [vmem:[#allocation6 + $0x60] sm:$0xff]
        %v218 = vld [vmem:[#allocation6 + $0x68] sm:$0xff]
        %v219 = vld [vmem:[#allocation6 + $0x70] sm:$0xff]
        %v220 = vld [vmem:[#allocation6 + $0x78] sm:$0xff]
        %v221 = vld [vmem:[#allocation2] sm:$0xff]
        %v222 = vld [vmem:[%s171] sm:$0xff]
        %223 = vmatpush.msra.mxu0 %v220
        %224 = vmatpush.msra.mxu0 %v219
        %225 = vmatpush.msra.mxu0 %v218
        %226 = vmatpush.msra.mxu0 %v217
        %227 = vmatpush.msra.mxu0 %v216
        %228 = vmatpush.msra.mxu0 %v215
        %229 = vmatpush.msra.mxu0 %v214
        %230 = vmatpush.msra.mxu0 %v213
        %231 = vmatpush.msra.mxu0 %v212
        %232 = vmatpush.msra.mxu0 %v211
        %233 = vmatpush.msra.mxu0 %v210
        %234 = vmatpush.msra.mxu0 %v209
        %235 = vmatpush.msra.mxu0 %v208
        %236 = vmatpush.msra.mxu0 %v207
        %237 = vmatpush.msra.mxu0 %v206
        %238 = vmatpush.msra.mxu0 %v205
        %239 = vmatmul.f32.gmra.mxu0 %v221
        %v240 = vpop.f32.mrf.mxu0
        %v241 = vadd.f32 0.0, %v240
        %242 = vdwg.mxu0
        %v243 = vadd.f32 %v222, %v241
        %v244 = vmax.f32 %v243, 0.0
        %v245 = vmul.f32 %v221, 0.0
        %v246 = vadd.f32 %v245, %v244
        %247 = vst [vmem:[%s197] sm:$0xff] %v246
        %s248 = scalar_lea.vmem %s171, 8 [#allocation3]
        %v249 = vld [vmem:[%s248] sm:$0xff]
        %250 = vmatpush.msra.mxu0 %v220
        %251 = vmatpush.msra.mxu0 %v219
        %252 = vmatpush.msra.mxu0 %v218
        %253 = vmatpush.msra.mxu0 %v217
        %254 = vmatpush.msra.mxu0 %v216
        %255 = vmatpush.msra.mxu0 %v215
        %256 = vmatpush.msra.mxu0 %v214
        %257 = vmatpush.msra.mxu0 %v213
        %258 = vmatpush.msra.mxu0 %v212
        %259 = vmatpush.msra.mxu0 %v211
        %260 = vmatpush.msra.mxu0 %v210
        %261 = vmatpush.msra.mxu0 %v209
        %262 = vmatpush.msra.mxu0 %v208
        %263 = vmatpush.msra.mxu0 %v207
        %264 = vmatpush.msra.mxu0 %v206
        %265 = vmatpush.msra.mxu0 %v205
        %266 = vmatmul.f32.gmra.mxu0 %v246
        %v267 = vpop.f32.mrf.mxu0
        %v268 = vadd.f32 0.0, %v267
        %269 = vdwg.mxu0
        %v270 = vadd.f32 %v249, %v268
        %v271 = vmax.f32 %v270, 0.0
        %v272 = vmul.f32 %v246, 0.0
        %v273 = vadd.f32 %v272, %v271
        %s274 = scalar_lea.vmem %s197, 8 [#allocation8]
        %275 = vst [vmem:[%s274] sm:$0xff] %v273
        %s276 = scalar_lea.vmem %s171, 16 [#allocation3]
        %v277 = vld [vmem:[%s276] sm:$0xff]
        %278 = vmatpush.msra.mxu0 %v220
        %279 = vmatpush.msra.mxu0 %v219
        %280 = vmatpush.msra.mxu0 %v218
        %281 = vmatpush.msra.mxu0 %v217
        %282 = vmatpush.msra.mxu0 %v216
        %283 = vmatpush.msra.mxu0 %v215
        %284 = vmatpush.msra.mxu0 %v214
        %285 = vmatpush.msra.mxu0 %v213
        %286 = vmatpush.msra.mxu0 %v212
        %287 = vmatpush.msra.mxu0 %v211
        %288 = vmatpush.msra.mxu0 %v210
        %289 = vmatpush.msra.mxu0 %v209
        %290 = vmatpush.msra.mxu0 %v208
        %291 = vmatpush.msra.mxu0 %v207
        %292 = vmatpush.msra.mxu0 %v206
        %293 = vmatpush.msra.mxu0 %v205
        %294 = vmatmul.f32.gmra.mxu0 %v273
        %v295 = vpop.f32.mrf.mxu0
        %v296 = vadd.f32 0.0, %v295
        %297 = vdwg.mxu0
        %v298 = vadd.f32 %v277, %v296
        %v299 = vmax.f32 %v298, 0.0
        %v300 = vmul.f32 %v273, 0.0
        %v301 = vadd.f32 %v300, %v299
        %s302 = scalar_lea.vmem %s197, 16 [#allocation8]
        %303 = vst [vmem:[%s302] sm:$0xff] %v301
        %s304 = scalar_lea.vmem %s171, 24 [#allocation3]
        %v305 = vld [vmem:[%s304] sm:$0xff]
        %306 = vmatpush.msra.mxu0 %v220
        %307 = vmatpush.msra.mxu0 %v219
        %308 = vmatpush.msra.mxu0 %v218
        %309 = vmatpush.msra.mxu0 %v217
        %310 = vmatpush.msra.mxu0 %v216
        %311 = vmatpush.msra.mxu0 %v215
        %312 = vmatpush.msra.mxu0 %v214
        %313 = vmatpush.msra.mxu0 %v213
        %314 = vmatpush.msra.mxu0 %v212
        %315 = vmatpush.msra.mxu0 %v211
        %316 = vmatpush.msra.mxu0 %v210
        %317 = vmatpush.msra.mxu0 %v209
        %318 = vmatpush.msra.mxu0 %v208
        %319 = vmatpush.msra.mxu0 %v207
        %320 = vmatpush.msra.mxu0 %v206
        %321 = vmatpush.msra.mxu0 %v205
        %322 = vmatmul.f32.gmra.mxu0 %v301
        %v323 = vpop.f32.mrf.mxu0
        %v324 = vadd.f32 0.0, %v323
        %325 = vdwg.mxu0
        %v326 = vadd.f32 %v305, %v324
        %v327 = vmax.f32 %v326, 0.0
        %v328 = vmul.f32 %v301, 0.0
        %v329 = vadd.f32 %v328, %v327
        %s330 = scalar_lea.vmem %s197, 24 [#allocation8]
        %331 = vst [vmem:[%s330] sm:$0xff] %v329
        %332 = vst [vmem:[#allocation2] sm:$0xff] %v329
        %s333 = sand.u32 %s91, 1
        %s334 = scalar_lea.sflag [#allocation5], %s333
        %s335 = sand.u32 %s91, 1
        %s336 = smul.addr %s335, 32
        %s337 = scalar_lea.vmem [#allocation8], %s336
        // Predicated region
        $region41: #{tpu_custom_call.1} parent=27 // pred_check
          %p338 = pneg %p101
        $region42: #{tpu_custom_call.1} parent=27 // pred_check_branch
          %340 = sbr.rel (%p338) target = $region44
        $region43: #{tpu_custom_call.1} parent=27 // pred_region
          %s341 = smul.u32 4, %s25
          %343 = vsyncadd %s334, 0
          %s344 = sadd.s32 %s24, %s341
          %s345 = smul.addr %s344, 8
          %s346 = scalar_lea.hbm %s2, %s345
          %s347 = sshll.u32 %s337, 4
          %s348 = int_to_ptr.vmem [resolvable:$true] %s347
          %s349 = sshll.u32 %s346, 4
          %s350 = int_to_ptr.hbm [resolvable:$true] %s349
          %355 = dma.vmem_to_hbm [thread:$0]  %s348, 512, %s350, %s334, 128, 128, 8
        $region44: #{tpu_custom_call.1} parent=27 // pred_fallthru
          _
      $region28: #{tpu_custom_call.1} parent=5 // pred_fallthru
        _
      %p356 = scmp.le.s32.totalorder 2, %s15
      // Predicated region
      $region45: #{tpu_custom_call.1} parent=5 // pred_check
        %p357 = pneg %p356
      $region46: #{tpu_custom_call.1} parent=5 // pred_check_branch
        %359 = sbr.rel (%p357) target = $region48
      $region47: #{tpu_custom_call.1} parent=5 // pred_region
        %s360 = ssub.s32 %s15, 2
        // Predicated region
        $region49: #{tpu_custom_call.1} parent=47 // pred_check
          %p361 = pneg %p107
        $region50: #{tpu_custom_call.1} parent=47 // pred_check_branch
          %363 = sbr.rel (%p361) target = $region52
        $region51: #{tpu_custom_call.1} parent=47 // pred_region
          %s364 = sand.u32 %s92, 1
          %s365 = scalar_lea.sflag [#allocation5], %s364
          %s366 = sand.u32 %s92, 1
          %s367 = smul.addr %s366, 32
          %s368 = scalar_lea.vmem [#allocation8], %s367
          %370 = dma.done %s365, 512
        $region52: #{tpu_custom_call.1} parent=47 // pred_fallthru
          _
      $region48: #{tpu_custom_call.1} parent=5 // pred_fallthru
        _
    $region6: #{tpu_custom_call.1} parent=1 // loop_footer
      %s19 = sadd.s32 1, %s15
    $region7: #{tpu_custom_call.1} parent=1 // loop_footer_branch
      %14 = sbr.rel target = $region3
    $region8: #{tpu_custom_call.1} parent=1 // loop_exit
      _
    %371 = vsyncpa [#allocation4], 1
    %s372 = scalar_lea.sflag [#allocation4], 1
    %373 = vsyncpa %s372, 1
    %374 = vsyncpa [#allocation7], 1
    %375 = vsyncpa [#allocation5], 1
    %s376 = scalar_lea.sflag [#allocation5], 1
    %377 = vsyncpa %s376, 1

</llo_original>
